<compile_context>
chip_gen: v6e
topology: v6e:2x2x1
jax: 0.10.0
libtpu: 0.0.40
codegen_flags: <defaults>
</compile_context>

<pallas_src>
import functools

import jax
import jax.numpy as jnp
import numpy as np
from jax import lax
from jax.experimental import pallas as pl
from jax.experimental.pallas import tpu as pltpu


def _round_up(x, m):
    return ((x + m - 1) // m) * m


def _sigmoid(x):
    # sigmoid(x) == 0.5 * tanh(0.5 x) + 0.5 : one EUP op instead of exp+div.
    return 0.5 * jnp.tanh(0.5 * x) + 0.5


def _pad_gate_cols(w, h, hp):
    """(K, 4h) -> (K, 4hp): gate g occupies columns [g*hp, g*hp + h)."""
    if h == hp:
        return w
    blocks = [jnp.pad(w[:, g * h:(g + 1) * h], ((0, 0), (0, hp - h)))
              for g in range(4)]
    return jnp.concatenate(blocks, axis=1)


def _pad_gate_vec(b, h, hp):
    """(4h,) -> (4hp,): gate g occupies [g*hp, g*hp + h)."""
    if h == hp:
        return b
    blocks = [jnp.pad(b[g * h:(g + 1) * h], (0, hp - h)) for g in range(4)]
    return jnp.concatenate(blocks)


def _vmem_limit_bytes():
    """Generation-aware scoped-VMEM limit (v5e/v6e: 128 MiB phys, v7x: 64)."""
    try:
        kind = jax.devices()[0].device_kind.lower()
    except Exception:
        kind = ""
    if "v5" in kind or "v6" in kind:
        return 100 * 1024 * 1024
    return 48 * 1024 * 1024          # v7x / unknown: conservative


def _choose_time_block(T, Bp, Hp, Li_max, budget_bytes):
    """Largest time block whose working set fits VMEM for BOTH kernels."""
    for tb in (64, 32, 16, 8, 4, 2, 1):
        tb = min(tb, T)
        rec = (2 * tb * Bp * 4 * Hp * 2       # gates_x in (dbl-buffered, bf16)
               + 2 * Hp * 4 * Hp * 2          # W_hh^T (dbl-buffered, bf16)
               + 2 * tb * Bp * Hp * 4         # out (dbl-buffered, worst f32)
               + Bp * Hp * (2 + 4))           # h (bf16) + c (f32) scratch
        gem = (2 * tb * Bp * Li_max * 2       # x block (bf16)
               + 2 * Li_max * 4 * Hp * 2      # W_ih^T (bf16)
               + 2 * tb * Bp * 4 * Hp * 2     # gates_x out (bf16)
               + 4 * Hp * 4)                  # bias
        if max(rec, gem) <= budget_bytes:
            return max(tb, 1)
    return 1


def _unroll_factor(tb, bb, hp):
    """Partial unroll keyed on the per-step f32 gate-tensor footprint so the
    fully-unrolled body never spills the 64x4KiB vreg file."""
    step_bytes = bb * 4 * hp * 4
    if tb <= 16 and step_bytes <= 16 * 1024:
        return tb                    # full unroll
    if step_bytes <= 64 * 1024:
        return min(4, tb)
    return min(2, tb)


# ---------------------------------------------------------------------------
# Kernel 1: batched input projection (time-parallel, off the serial path)
# ---------------------------------------------------------------------------
def _gates_kernel(x_ref, wih_ref, b_ref, out_ref, *, tb, bp):
    x2 = x_ref[...].reshape(tb * bp, -1)                    # (Tb*Bp, Li) bf16
    g = jnp.dot(x2, wih_ref[...], preferred_element_type=jnp.float32)
    g = g + b_ref[...]                                      # f32 bias add
    out_ref[...] = g.astype(out_ref.dtype).reshape(tb, bp, -1)


def _gates_gemm(x_p, wih, bias, *, Tb, vmem_limit):
    Tp, Bp, Li = x_p.shape
    G = wih.shape[1]                                        # 4 * Hp
    n_blocks = Tp // Tb
    kernel = functools.partial(_gates_kernel, tb=Tb, bp=Bp)
    return pl.pallas_call(
        kernel,
        out_shape=jax.ShapeDtypeStruct((Tp, Bp, G), jnp.bfloat16),
        grid_spec=pltpu.PrefetchScalarGridSpec(
            num_scalar_prefetch=0,
            grid=(n_blocks,),
            in_specs=[
                pl.BlockSpec((Tb, Bp, Li), lambda i: (i, 0, 0)),   # x block
                pl.BlockSpec((Li, G), lambda i: (0, 0)),           # W_ih^T
                pl.BlockSpec((1, G), lambda i: (0, 0)),            # bias
            ],
            out_specs=pl.BlockSpec((Tb, Bp, G), lambda i: (i, 0, 0)),
        ),
        compiler_params=pltpu.CompilerParams(
            dimension_semantics=("parallel",),
            vmem_limit_bytes=vmem_limit,
        ),
    )(x_p, wih, bias)


# ---------------------------------------------------------------------------
# Kernel 2: recurrence only (serial over time, parallel over batch chunks)
# ---------------------------------------------------------------------------
def _recurrence_kernel(gx_ref, whh_ref, out_ref, h_scr, c_scr,
                       *, tb, hp, unroll):
    @pl.when(pl.program_id(1) == 0)
    def _():
        h_scr[...] = jnp.zeros_like(h_scr)
        c_scr[...] = jnp.zeros_like(c_scr)

    whh = whh_ref[...]          # (Hp, 4Hp) bf16, invariant across the block

    def step(t, carry):
        h_prev = h_scr[...]                     # bf16 (no cast on the chain)
        c_prev = c_scr[...]                     # f32
        g = gx_ref[t] + jnp.dot(h_prev, whh,
                                preferred_element_type=jnp.float32)
        # lane-aligned gate slices (Hp is a multiple of 128)
        i_g = _sigmoid(g[:, 0 * hp:1 * hp])
        f_g = _sigmoid(g[:, 1 * hp:2 * hp])
        g_g = jnp.tanh(g[:, 2 * hp:3 * hp])
        o_g = _sigmoid(g[:, 3 * hp:4 * hp])
        c_new = f_g * c_prev + i_g * g_g
        h_new = o_g * jnp.tanh(c_new)
        c_scr[...] = c_new
        h_scr[...] = h_new.astype(h_scr.dtype)
        out_ref[t] = h_new.astype(out_ref.dtype)   # lane-dense (Bb, Hp) store
        return carry

    lax.fori_loop(0, tb, step, 0, unroll=unroll)


def _recurrence(gx, whh, *, Tb, n_bsplit, out_dtype, vmem_limit):
    Tp, Bp, G = gx.shape
    Hp = whh.shape[0]
    n_blocks = Tp // Tb
    Bb = Bp // n_bsplit
    unroll = _unroll_factor(Tb, Bb, Hp)
    kernel = functools.partial(_recurrence_kernel, tb=Tb, hp=Hp, unroll=unroll)
    return pl.pallas_call(
        kernel,
        out_shape=jax.ShapeDtypeStruct((Tp, Bp, Hp), out_dtype),
        grid_spec=pltpu.PrefetchScalarGridSpec(
            num_scalar_prefetch=0,
            grid=(n_bsplit, n_blocks),          # serial time axis last
            in_specs=[
                pl.BlockSpec((Tb, Bb, G), lambda b, t: (t, b, 0)),  # gates_x
                pl.BlockSpec((Hp, G), lambda b, t: (0, 0)),         # W_hh^T
            ],
            out_specs=pl.BlockSpec((Tb, Bb, Hp), lambda b, t: (t, b, 0)),
            scratch_shapes=[
                pltpu.VMEM((Bb, Hp), jnp.bfloat16),   # h state (carried)
                pltpu.VMEM((Bb, Hp), jnp.float32),    # c state (carried)
            ],
        ),
        compiler_params=pltpu.CompilerParams(
            dimension_semantics=("parallel", "arbitrary"),
            vmem_limit_bytes=vmem_limit,
        ),
    )(gx, whh)


# ---------------------------------------------------------------------------
# Module-level wrappers
# ---------------------------------------------------------------------------
def prepare_lstm_params(raw_params, hidden_dim):
    """One-time weight prep (hoisted off the forward path): per-gate padding
    to the 128-lane tile, hidden-row padding for layers >= 1, bf16 cast."""
    H = hidden_dim
    Hp = _round_up(H, 128)
    prepared = []
    for layer, p in enumerate(raw_params):
        w_ih_t = jnp.asarray(p["w_ih_t"], jnp.float32)   # (Li, 4H)
        w_hh_t = jnp.asarray(p["w_hh_t"], jnp.float32)   # (H, 4H)
        bias = jnp.asarray(p["bias"], jnp.float32).reshape(-1)
        if layer > 0:
            # layers >= 1 consume padded (.., Hp) activations whose padded
            # columns are exactly zero -> zero-pad the matching weight rows.
            w_ih_t = jnp.pad(w_ih_t, ((0, Hp - H), (0, 0)))
        wih_p = _pad_gate_cols(w_ih_t, H, Hp).astype(jnp.bfloat16)
        whh_p = _pad_gate_cols(jnp.pad(w_hh_t, ((0, Hp - H), (0, 0))), H, Hp
                               ).astype(jnp.bfloat16)
        b_p = _pad_gate_vec(bias, H, Hp).reshape(1, 4 * Hp).astype(jnp.float32)
        prepared.append({"w_ih_t": wih_p, "w_hh_t": whh_p, "bias": b_p,
                         "H": H, "Hp": Hp})
    return prepared


def lstm_module_forward(x, prepared_params):
    """Equivalent of LSTMModule.forward (eval mode; dropout == identity).

    x: (seq_len, batch, input_dim) f32 -> (seq_len, batch, hidden_dim) f32.
    """
    T, B, Li0 = x.shape
    H = prepared_params[-1]["H"]
    Hp = prepared_params[0]["Hp"]

    Bp = _round_up(B, 16)                     # bf16 sublane tile
    vmem_limit = _vmem_limit_bytes()
    Tb = _choose_time_block(T, Bp, Hp, max(Li0, Hp), int(vmem_limit * 0.7))
    Tp = _round_up(T, Tb)
    # v7x: give the second TensorCore half the batch when it stays tile-aligned.
    n_bsplit = 2 if Bp % 32 == 0 else 1

    # Pad once (time + batch) and cast to bf16; padded bf16 activations stay
    # padded between layers, only sliced / cast back after the last layer.
    act = jnp.pad(x, ((0, Tp - T), (0, Bp - B), (0, 0))).astype(jnp.bfloat16)

    n_layers = len(prepared_params)
    for layer, p in enumerate(prepared_params):
        gx = _gates_gemm(act, p["w_ih_t"], p["bias"], Tb=Tb,
                         vmem_limit=vmem_limit)
        act = _recurrence(gx, p["w_hh_t"], Tb=Tb, n_bsplit=n_bsplit,
                          out_dtype=(jnp.float32 if layer == n_layers - 1
                                     else jnp.bfloat16),
                          vmem_limit=vmem_limit)

    return act[:T, :B, :H].astype(jnp.float32)


def init_lstm_params(key, input_dim, hidden_dim, num_layers,
                     init_weight_value=2.0):
    """Parameter init mirroring the PyTorch module's shapes/init.

    Layer 0 W_ih/W_hh get xavier_normal(gain=sqrt(init_weight_value)); other
    tensors use PyTorch's default uniform(-1/sqrt(H), 1/sqrt(H)) init.
    """
    params = []
    for layer in range(num_layers):
        li = input_dim if layer == 0 else hidden_dim
        k = 1.0 / np.sqrt(hidden_dim)
        key, k1, k2, k3, k4 = jax.random.split(key, 5)
        if layer == 0:
            gain = np.sqrt(init_weight_value)
            std_ih = gain * np.sqrt(2.0 / (4 * hidden_dim + li))
            std_hh = gain * np.sqrt(2.0 / (4 * hidden_dim + hidden_dim))
            w_ih = std_ih * jax.random.normal(k1, (4 * hidden_dim, li), jnp.float32)
            w_hh = std_hh * jax.random.normal(k2, (4 * hidden_dim, hidden_dim), jnp.float32)
        else:
            w_ih = jax.random.uniform(k1, (4 * hidden_dim, li), jnp.float32, -k, k)
            w_hh = jax.random.uniform(k2, (4 * hidden_dim, hidden_dim), jnp.float32, -k, k)
        b_ih = jax.random.uniform(k3, (4 * hidden_dim,), jnp.float32, -k, k)
        b_hh = jax.random.uniform(k4, (4 * hidden_dim,), jnp.float32, -k, k)
        params.append({
            "w_ih_t": w_ih.T,             # (li, 4H)
            "w_hh_t": w_hh.T,             # (H, 4H)
            "bias": b_ih + b_hh,          # (4H,)
        })
    return params


def lstm_reference(x, params):
    """Pure-JAX f32 reference (lax.scan) for correctness checking."""
    out = x
    for p in params:
        H = p["w_hh_t"].shape[0]
        B = x.shape[1]

        def step(carry, x_t, p=p, H=H):
            h, c = carry
            gates = x_t @ p["w_ih_t"] + h @ p["w_hh_t"] + p["bias"]
            i = jax.nn.sigmoid(gates[:, 0 * H:1 * H])
            f = jax.nn.sigmoid(gates[:, 1 * H:2 * H])
            g = jnp.tanh(gates[:, 2 * H:3 * H])
            o = jax.nn.sigmoid(gates[:, 3 * H:4 * H])
            c = f * c + i * g
            h = o * jnp.tanh(c)
            return (h, c), h

        init = (jnp.zeros((B, H), jnp.float32), jnp.zeros((B, H), jnp.float32))
        _, out = jax.lax.scan(step, init, out)
    return out


if __name__ == "__main__":
    seq_len, batch, input_dim, hidden_dim, num_layers = 8, 4, 16, 32, 2

    key = jax.random.PRNGKey(0)
    key, kx = jax.random.split(key)
    x = jax.random.normal(kx, (seq_len, batch, input_dim), jnp.float32)

    raw_params = init_lstm_params(key, input_dim, hidden_dim, num_layers)
    prepared = prepare_lstm_params(raw_params, hidden_dim)   # one-time prep

    out = jax.block_until_ready(lstm_module_forward(x, prepared))
    ref = jax.block_until_ready(lstm_reference(x, raw_params))

    # bf16 matmul operands / gates_x / inter-layer activations with f32
    # accumulation & cell state -> loosened tolerance.
    np.testing.assert_allclose(np.asarray(out), np.asarray(ref),
                               rtol=3e-2, atol=3e-2)

    assert out.shape == (seq_len, batch, hidden_dim)
    print("KERNEL_OK")
</pallas_src>

<mosaic_0001>
module attributes {stable_mosaic.version = 11 : i64} {
  func.func @_gates_kernel(%arg0: i32, %arg1: memref<8x16x16xbf16, #tpu.memory_space<vmem>>, %arg2: memref<16x512xbf16, #tpu.memory_space<vmem>>, %arg3: memref<1x512xf32, #tpu.memory_space<vmem>>, %arg4: memref<8x16x512xbf16, #tpu.memory_space<vmem>>) attributes {dimension_semantics = [#tpu.dimension_semantics<parallel>], iteration_bounds = array<i64: 1>, scalar_prefetch = 0 : i64, scratch_operands = 0 : i64, tpu.core_type = #tpu.core_type<tc>, window_params = [{transform_indices = @transform_0, window_bounds = array<i64: 8, 16, 16>}, {pipeline_mode = #tpu.pipeline_mode<synchronous>, transform_indices = @transform_1, window_bounds = array<i64: 16, 512>}, {pipeline_mode = #tpu.pipeline_mode<synchronous>, transform_indices = @transform_2, window_bounds = array<i64: 1, 512>}, {transform_indices = @transform_3, window_bounds = array<i64: 8, 16, 512>}]} {
    %c0 = arith.constant 0 : index
    %c0_0 = arith.constant 0 : index
    %c0_1 = arith.constant 0 : index
    %0 = vector.load %arg1[%c0, %c0_0, %c0_1] : memref<8x16x16xbf16, #tpu.memory_space<vmem>>, vector<8x16x16xbf16>
    %1 = vector.shape_cast %0 : vector<8x16x16xbf16> to vector<128x16xbf16>
    %c0_2 = arith.constant 0 : index
    %c0_3 = arith.constant 0 : index
    %2 = vector.load %arg2[%c0_2, %c0_3] : memref<16x512xbf16, #tpu.memory_space<vmem>>, vector<16x512xbf16>
    %cst = arith.constant dense<0.000000e+00> : vector<128x512xf32>
    %3 = tpu.matmul %1, %2, %cst {dimension_numbers = #tpu.dot_dimension_numbers<[1], [0], [0], [1], [0, 0, 1, 1], [], []>} : vector<128x16xbf16>, vector<16x512xbf16>, vector<128x512xf32> -> vector<128x512xf32>
    %c0_4 = arith.constant 0 : index
    %c0_5 = arith.constant 0 : index
    %4 = vector.load %arg3[%c0_4, %c0_5] : memref<1x512xf32, #tpu.memory_space<vmem>>, vector<1x512xf32>
    %5 = vector.broadcast %4 : vector<1x512xf32> to vector<128x512xf32>
    %6 = arith.addf %3, %5 : vector<128x512xf32>
    %7 = arith.truncf %6 : vector<128x512xf32> to vector<128x512xbf16>
    %8 = vector.shape_cast %7 : vector<128x512xbf16> to vector<8x16x512xbf16>
    %c0_6 = arith.constant 0 : index
    %c0_7 = arith.constant 0 : index
    %c0_8 = arith.constant 0 : index
    %9 = vector.load %arg4[%c0_6, %c0_7, %c0_8] : memref<8x16x512xbf16, #tpu.memory_space<vmem>>, vector<8x16x512xbf16>
    tpu.vector_store %arg4[%c0_6, %c0_7, %c0_8], %8 {strides = array<i32>} : memref<8x16x512xbf16, #tpu.memory_space<vmem>>, vector<8x16x512xbf16>,
    return
  }
  func.func @transform_0(%arg0: i32) -> (i32, i32, i32) {
    %c0_i32 = arith.constant 0 : i32
    %c0_i32_0 = arith.constant 0 : i32
    %c0_i32_1 = arith.constant 0 : i32
    return %arg0, %c0_i32, %c0_i32_0 : i32, i32, i32
  }
  func.func @transform_1(%arg0: i32) -> (i32, i32) {
    %c0_i32 = arith.constant 0 : i32
    %c0_i32_0 = arith.constant 0 : i32
    %c0_i32_1 = arith.constant 0 : i32
    return %c0_i32, %c0_i32_0 : i32, i32
  }
  func.func @transform_2(%arg0: i32) -> (i32, i32) {
    %c0_i32 = arith.constant 0 : i32
    %c0_i32_0 = arith.constant 0 : i32
    %c0_i32_1 = arith.constant 0 : i32
    return %c0_i32, %c0_i32_0 : i32, i32
  }
  func.func @transform_3(%arg0: i32) -> (i32, i32, i32) {
    %c0_i32 = arith.constant 0 : i32
    %c0_i32_0 = arith.constant 0 : i32
    %c0_i32_1 = arith.constant 0 : i32
    return %arg0, %c0_i32, %c0_i32_0 : i32, i32, i32
  }
}

</mosaic_0001>

<llo_original>
// kernel: tpu_custom_call.1
$region0: #{tpu_custom_call.1}
  #allocation0 [shape = 'u32[]', space=smem, size = 0x4, offset = 0x4, fixed_abs, tag = 'smem constant byte address 0x4 - core index']
  #allocation1 [shape = 'u32[144,128]{1,0:T(1,128)}', space=vmem, size = 0x12000, scoped, tag = 'internal scratch']
  %s0 = inlined_call_operand.hbm [shape: bf16[8,16,16], index: 0, kind: input, shape index: {}]
  %s1 = inlined_call_operand.hbm [shape: bf16[16,512], index: 1, kind: input, shape index: {}]
  %s2 = inlined_call_operand.hbm [shape: f32[1,512], index: 2, kind: input, shape index: {}]
  %s3 = inlined_call_operand.hbm [shape: bf16[8,16,512], index: 3, kind: output, shape index: {}]
  %s4 = sld [smem:[#allocation0]]
  $region34: #{tpu_custom_call.1} parent=0
    _
  %s6 = ssub.s32 1, %s4
  %s7 = scalar_select 0, %s6, %s4
  $region1: #{tpu_custom_call.1} parent=0
    #allocation2 [shape = 'u8[32768]{0}', space=vmem, size = 0x8000, scoped, tag = 'input window, operand 0, single buffered']
    #allocation3 [shape = 's32[1]{0}', space=sflag, size = 0x4, scoped, tag = 'scoped memory for tpu_custom_call.1']
    #allocation4 [shape = 's32[1]{0}', space=sflag, size = 0x4, scoped, tag = 'scoped memory for tpu_custom_call.1']
    #allocation5 [shape = 'u8[16384]{0}', space=vmem, size = 0x4000, scoped, tag = 'input window, operand 1, single buffered']
    #allocation6 [shape = 's32[1]{0}', space=sflag, size = 0x4, scoped, tag = 'scoped memory for tpu_custom_call.1']
    #allocation7 [shape = 'u8[2048]{0}', space=vmem, size = 0x800, scoped, tag = 'input window, operand 2, single buffered']
    #allocation8 [shape = 'u8[131072]{0}', space=vmem, size = 0x20000, scoped, tag = 'output window, operand 0, single buffered']
    %8 = vsyncpa [#allocation3], 0
    %9 = vsyncpa [#allocation6], 0
    %10 = vsyncpa [#allocation4], 0
    // Predicated region
    $region2: #{tpu_custom_call.1} parent=1 // pred_check
      _
    $region3: #{tpu_custom_call.1} parent=1 // pred_check_branch
      %12 = sbr.rel (0) target = $region5
    $region4: #{tpu_custom_call.1} parent=1 // pred_region
      %s14 = ssub.s32 1024, 1024
      %15 = vsyncadd [#allocation3], %s14
      %s16 = sshll.u32 [#allocation2], 4
      %s17 = int_to_ptr.vmem [resolvable:$true] %s16
      %22 = dma.hbm_to_vmem [thread:$0]  %s0, 1024, %s17, [#allocation3], 64, 64, 4
    $region5: #{tpu_custom_call.1} parent=1 // pred_fallthru
      _
    // Predicated region
    $region6: #{tpu_custom_call.1} parent=1 // pred_check
      _
    $region7: #{tpu_custom_call.1} parent=1 // pred_check_branch
      %24 = sbr.rel (0) target = $region9
    $region8: #{tpu_custom_call.1} parent=1 // pred_region
      %s26 = ssub.s32 512, 512
      %27 = vsyncadd [#allocation6], %s26
      %s28 = sshll.u32 [#allocation5], 4
      %s29 = int_to_ptr.vmem [resolvable:$true] %s28
      %34 = dma.hbm_to_vmem [thread:$0]  %s1, 512, %s29, [#allocation6], 256, 256, 16
    $region9: #{tpu_custom_call.1} parent=1 // pred_fallthru
      _
    // Predicated region
    $region10: #{tpu_custom_call.1} parent=1 // pred_check
      _
    $region11: #{tpu_custom_call.1} parent=1 // pred_check_branch
      %36 = sbr.rel (0) target = $region13
    $region12: #{tpu_custom_call.1} parent=1 // pred_region
      %s38 = ssub.s32 64, 64
      %39 = vsyncadd [#allocation6], %s38
      %s41 = sshll.u32 [#allocation7], 4
      %s42 = int_to_ptr.vmem [resolvable:$true] %s41
      %44 = dma.hbm_to_vmem [thread:$0]  %s2, 64, %s42, [#allocation6]
    $region13: #{tpu_custom_call.1} parent=1 // pred_fallthru
      _
    // Predicated region
    $region14: #{tpu_custom_call.1} parent=1 // pred_check
      _
    $region15: #{tpu_custom_call.1} parent=1 // pred_check_branch
      %46 = sbr.rel (0) target = $region17
    $region16: #{tpu_custom_call.1} parent=1 // pred_region
      %47 = dma.done [#allocation3], 1024
    $region17: #{tpu_custom_call.1} parent=1 // pred_fallthru
      _
    // Predicated region
    $region18: #{tpu_custom_call.1} parent=1 // pred_check
      _
    $region19: #{tpu_custom_call.1} parent=1 // pred_check_branch
      %49 = sbr.rel (0) target = $region21
    $region20: #{tpu_custom_call.1} parent=1 // pred_region
      %50 = dma.done [#allocation6], 512
    $region21: #{tpu_custom_call.1} parent=1 // pred_fallthru
      _
    // Predicated region
    $region22: #{tpu_custom_call.1} parent=1 // pred_check
      _
    $region23: #{tpu_custom_call.1} parent=1 // pred_check_branch
      %52 = sbr.rel (0) target = $region25
    $region24: #{tpu_custom_call.1} parent=1 // pred_region
      %53 = dma.done [#allocation6], 64
    $region25: #{tpu_custom_call.1} parent=1 // pred_fallthru
      _
    %v55 = vld [vmem:[#allocation2] sm:$0xf]
    %v56 = vld [vmem:[#allocation2 + $0x4] sm:$0xf]
    %v57 = vld [vmem:[#allocation2 + $0x8] sm:$0xf]
    %v58 = vld [vmem:[#allocation2 + $0xc] sm:$0xf]
    %v59 = vld [vmem:[#allocation2 + $0x10] sm:$0xf]
    %v60 = vld [vmem:[#allocation2 + $0x14] sm:$0xf]
    %v61 = vld [vmem:[#allocation2 + $0x18] sm:$0xf]
    %v62 = vld [vmem:[#allocation2 + $0x1c] sm:$0xf]
    %v63 = vld [vmem:[#allocation2 + $0x20] sm:$0xf]
    %v64 = vld [vmem:[#allocation2 + $0x24] sm:$0xf]
    %v65 = vld [vmem:[#allocation2 + $0x28] sm:$0xf]
    %v66 = vld [vmem:[#allocation2 + $0x2c] sm:$0xf]
    %v67 = vld [vmem:[#allocation2 + $0x30] sm:$0xf]
    %v68 = vld [vmem:[#allocation2 + $0x34] sm:$0xf]
    %v69 = vld [vmem:[#allocation2 + $0x38] sm:$0xf]
    %v70 = vld [vmem:[#allocation2 + $0x3c] sm:$0xf]
    %v71 = vld [vmem:[#allocation5] sm:$0xff]
    %v72 = vld [vmem:[#allocation5 + $0x8] sm:$0xff]
    %v73 = vld [vmem:[#allocation5 + $0x10] sm:$0xff]
    %v74 = vld [vmem:[#allocation5 + $0x18] sm:$0xff]
    %v75 = vld [vmem:[#allocation7] sm:$0xf]
    %v77 = vlaneseq
    %v78 = vshrl.u32 %v77, 7
    %v79 = vsub.s32 0, %v78
    %v80 = vrot.slane %v75, %v79
    %v81 = vlaneseq
    %v82 = vshrl.u32 %v81, 7
    %v83 = vsub.s32 1, %v82
    %v84 = vrot.slane %v75, %v83
    %v85 = vlaneseq
    %v86 = vshrl.u32 %v85, 7
    %v87 = vsub.s32 2, %v86
    %v88 = vrot.slane %v75, %v87
    %v89 = vlaneseq
    %v90 = vshrl.u32 %v89, 7
    %v91 = vsub.s32 3, %v90
    %v92 = vrot.slane %v75, %v91
    %v113 = vunpack.c.l.b16 %v55
    %v114 = vunpack.c.l.b16 %v56
    %v115 = vunpack.c.l.b16 %v57
    %v116 = vunpack.c.l.b16 %v58
    %v117 = vunpack.c.l.b16 %v59
    %v118 = vunpack.c.l.b16 %v60
    %v119 = vunpack.c.l.b16 %v61
    %v120 = vunpack.c.l.b16 %v62
    %v121 = vunpack.c.l.b16 %v63
    %v122 = vunpack.c.l.b16 %v64
    %v123 = vunpack.c.l.b16 %v65
    %v124 = vunpack.c.l.b16 %v66
    %v125 = vunpack.c.l.b16 %v67
    %v126 = vunpack.c.l.b16 %v68
    %v127 = vunpack.c.l.b16 %v69
    %v128 = vunpack.c.l.b16 %v70
    %v129 = vpack.c.b16 %v114, %v113
    %v130 = vpack.c.b16 %v116, %v115
    %v131 = vpack.c.b16 %v118, %v117
    %v132 = vpack.c.b16 %v120, %v119
    %v133 = vpack.c.b16 %v122, %v121
    %v134 = vpack.c.b16 %v124, %v123
    %v135 = vpack.c.b16 %v126, %v125
    %v136 = vpack.c.b16 %v128, %v127
    %v141 = vunpack.c.l.b16 %v71
    %v142 = vunpack.c.h.b16 %v71
    %v143 = vunpack.c.l.b16 %v72
    %v144 = vunpack.c.h.b16 %v72
    %v145 = vunpack.c.l.b16 %v73
    %v146 = vunpack.c.h.b16 %v73
    %v147 = vunpack.c.l.b16 %v74
    %v148 = vunpack.c.h.b16 %v74
    %v149 = vpack.c.b16 %v145, %v141
    %v150 = vpack.c.b16 %v146, %v142
    %v151 = vpack.c.b16 %v147, %v143
    %v152 = vpack.c.b16 %v148, %v144
    %vm157 = vcmask 130048
    %v159 = vsel %vm157, %v129, 0
    %v162 = vsel %vm157, %v130, 0
    %v165 = vsel %vm157, %v131, 0
    %v168 = vsel %vm157, %v132, 0
    %v171 = vsel %vm157, %v133, 0
    %v174 = vsel %vm157, %v134, 0
    %v177 = vsel %vm157, %v135, 0
    %v180 = vsel %vm157, %v136, 0
    %182 = vmatprep.subr.bf16.mxu0 0
    %183 = vmatpush1.bf16.msra.mxu0 0
    %184 = vmatprep.subr.bf16.mxu0 0
    %185 = vmatpush1.bf16.msra.mxu0 0
    %186 = vmatprep.subr.bf16.mxu0 0
    %187 = vmatpush1.bf16.msra.mxu0 0
    %188 = vmatprep.subr.bf16.mxu0 0
    %189 = vmatpush1.bf16.msra.mxu0 0
    %190 = vmatprep.subr.bf16.mxu0 0
    %191 = vmatpush1.bf16.msra.mxu0 0
    %192 = vmatprep.subr.bf16.mxu0 0
    %193 = vmatpush1.bf16.msra.mxu0 0
    %194 = vmatprep.subr.bf16.mxu0 0
    %195 = vmatpush1.bf16.msra.mxu0 0
    %196 = vmatprep.subr.bf16.mxu0 %v150
    %197 = vmatpush1.bf16.msra.mxu0 %v149
    %198 = vmatprep.subr.bf16.mxu0 0
    %199 = vmatpush2.bf16.msra.mxu0 0
    %200 = vmatprep.subr.bf16.mxu0 0
    %201 = vmatpush2.bf16.msra.mxu0 0
    %202 = vmatprep.subr.bf16.mxu0 0
    %203 = vmatpush2.bf16.msra.mxu0 0
    %204 = vmatprep.subr.bf16.mxu0 0
    %205 = vmatpush2.bf16.msra.mxu0 0
    %206 = vmatprep.subr.bf16.mxu0 0
    %207 = vmatpush2.bf16.msra.mxu0 0
    %208 = vmatprep.subr.bf16.mxu0 0
    %209 = vmatpush2.bf16.msra.mxu0 0
    %210 = vmatprep.subr.bf16.mxu0 0
    %211 = vmatpush2.bf16.msra.mxu0 0
    %212 = vmatprep.subr.bf16.mxu0 0
    %213 = vmatpush2.bf16.msra.mxu0 0
    %214 = vmatprep.mubr.bf16.mxu0 0
    %215 = vmatmul.mubr.bf16.gmra.mxu0 %v159
    %v216 = vpop.f32.mrf.mxu0
    %v217 = vadd.f32 %v80, %v216
    %v218 = vpop.f32.mrf.mxu0
    %v219 = vadd.f32 %v84, %v218
    %v220 = vpop.f32.mrf.mxu0
    %v221 = vadd.f32 %v80, %v220
    %v222 = vpop.f32.mrf.mxu0
    %v223 = vadd.f32 %v84, %v222
    %224 = vmatprep.mubr.bf16.mxu0 0
    %225 = vmatmul.mubr.bf16.gmra.mxu0 %v162
    %v226 = vpop.f32.mrf.mxu0
    %v227 = vadd.f32 %v80, %v226
    %v228 = vpop.f32.mrf.mxu0
    %v229 = vadd.f32 %v84, %v228
    %v230 = vpop.f32.mrf.mxu0
    %v231 = vadd.f32 %v80, %v230
    %v232 = vpop.f32.mrf.mxu0
    %v233 = vadd.f32 %v84, %v232
    %234 = vmatprep.mubr.bf16.mxu0 0
    %235 = vmatmul.mubr.bf16.gmra.mxu0 %v165
    %v236 = vpop.f32.mrf.mxu0
    %v237 = vadd.f32 %v80, %v236
    %v238 = vpop.f32.mrf.mxu0
    %v239 = vadd.f32 %v84, %v238
    %v240 = vpop.f32.mrf.mxu0
    %v241 = vadd.f32 %v80, %v240
    %v242 = vpop.f32.mrf.mxu0
    %v243 = vadd.f32 %v84, %v242
    %244 = vmatprep.mubr.bf16.mxu0 0
    %245 = vmatmul.mubr.bf16.gmra.mxu0 %v168
    %v246 = vpop.f32.mrf.mxu0
    %v247 = vadd.f32 %v80, %v246
    %v248 = vpop.f32.mrf.mxu0
    %v249 = vadd.f32 %v84, %v248
    %v250 = vpop.f32.mrf.mxu0
    %v251 = vadd.f32 %v80, %v250
    %v252 = vpop.f32.mrf.mxu0
    %v253 = vadd.f32 %v84, %v252
    %254 = vmatprep.mubr.bf16.mxu0 0
    %255 = vmatmul.mubr.bf16.gmra.mxu0 %v171
    %v256 = vpop.f32.mrf.mxu0
    %v257 = vadd.f32 %v80, %v256
    %v258 = vpop.f32.mrf.mxu0
    %v259 = vadd.f32 %v84, %v258
    %v260 = vpop.f32.mrf.mxu0
    %v261 = vadd.f32 %v80, %v260
    %v262 = vpop.f32.mrf.mxu0
    %v263 = vadd.f32 %v84, %v262
    %264 = vmatprep.mubr.bf16.mxu0 0
    %265 = vmatmul.mubr.bf16.gmra.mxu0 %v174
    %v266 = vpop.f32.mrf.mxu0
    %v267 = vadd.f32 %v80, %v266
    %v268 = vpop.f32.mrf.mxu0
    %v269 = vadd.f32 %v84, %v268
    %v270 = vpop.f32.mrf.mxu0
    %v271 = vadd.f32 %v80, %v270
    %v272 = vpop.f32.mrf.mxu0
    %v273 = vadd.f32 %v84, %v272
    %274 = vmatprep.mubr.bf16.mxu0 0
    %275 = vmatmul.mubr.bf16.gmra.mxu0 %v177
    %v276 = vpop.f32.mrf.mxu0
    %v277 = vadd.f32 %v80, %v276
    %v278 = vpop.f32.mrf.mxu0
    %v279 = vadd.f32 %v84, %v278
    %v280 = vpop.f32.mrf.mxu0
    %v281 = vadd.f32 %v80, %v280
    %v282 = vpop.f32.mrf.mxu0
    %v283 = vadd.f32 %v84, %v282
    %284 = vmatprep.mubr.bf16.mxu0 0
    %285 = vmatmul.mubr.bf16.gmra.mxu0 %v180
    %v286 = vpop.f32.mrf.mxu0
    %v287 = vadd.f32 %v80, %v286
    %v288 = vpop.f32.mrf.mxu0
    %v289 = vadd.f32 %v84, %v288
    %v290 = vpop.f32.mrf.mxu0
    %v291 = vadd.f32 %v80, %v290
    %v292 = vpop.f32.mrf.mxu0
    %v293 = vadd.f32 %v84, %v292
    %294 = vdwg.mxu0
    %295 = vmatprep.subr.bf16.mxu0 0
    %296 = vmatpush1.bf16.msra.mxu0 0
    %297 = vmatprep.subr.bf16.mxu0 0
    %298 = vmatpush1.bf16.msra.mxu0 0
    %299 = vmatprep.subr.bf16.mxu0 0
    %300 = vmatpush1.bf16.msra.mxu0 0
    %301 = vmatprep.subr.bf16.mxu0 0
    %302 = vmatpush1.bf16.msra.mxu0 0
    %303 = vmatprep.subr.bf16.mxu0 0
    %304 = vmatpush1.bf16.msra.mxu0 0
    %305 = vmatprep.subr.bf16.mxu0 0
    %306 = vmatpush1.bf16.msra.mxu0 0
    %307 = vmatprep.subr.bf16.mxu0 0
    %308 = vmatpush1.bf16.msra.mxu0 0
    %309 = vmatprep.subr.bf16.mxu0 %v152
    %310 = vmatpush1.bf16.msra.mxu0 %v151
    %311 = vmatprep.subr.bf16.mxu0 0
    %312 = vmatpush2.bf16.msra.mxu0 0
    %313 = vmatprep.subr.bf16.mxu0 0
    %314 = vmatpush2.bf16.msra.mxu0 0
    %315 = vmatprep.subr.bf16.mxu0 0
    %316 = vmatpush2.bf16.msra.mxu0 0
    %317 = vmatprep.subr.bf16.mxu0 0
    %318 = vmatpush2.bf16.msra.mxu0 0
    %319 = vmatprep.subr.bf16.mxu0 0
    %320 = vmatpush2.bf16.msra.mxu0 0
    %321 = vmatprep.subr.bf16.mxu0 0
    %322 = vmatpush2.bf16.msra.mxu0 0
    %323 = vmatprep.subr.bf16.mxu0 0
    %324 = vmatpush2.bf16.msra.mxu0 0
    %325 = vmatprep.subr.bf16.mxu0 0
    %326 = vmatpush2.bf16.msra.mxu0 0
    %327 = vmatprep.mubr.bf16.mxu0 0
    %328 = vmatmul.mubr.bf16.gmra.mxu0 %v159
    %v329 = vpop.f32.mrf.mxu0
    %v330 = vadd.f32 %v88, %v329
    %v331 = vpop.f32.mrf.mxu0
    %v332 = vadd.f32 %v92, %v331
    %v333 = vpop.f32.mrf.mxu0
    %v334 = vadd.f32 %v88, %v333
    %v335 = vpop.f32.mrf.mxu0
    %v336 = vadd.f32 %v92, %v335
    %337 = vmatprep.mubr.bf16.mxu0 0
    %338 = vmatmul.mubr.bf16.gmra.mxu0 %v162
    %v339 = vpop.f32.mrf.mxu0
    %v340 = vadd.f32 %v88, %v339
    %v341 = vpop.f32.mrf.mxu0
    %v342 = vadd.f32 %v92, %v341
    %v343 = vpop.f32.mrf.mxu0
    %v344 = vadd.f32 %v88, %v343
    %v345 = vpop.f32.mrf.mxu0
    %v346 = vadd.f32 %v92, %v345
    %347 = vmatprep.mubr.bf16.mxu0 0
    %348 = vmatmul.mubr.bf16.gmra.mxu0 %v165
    %v349 = vpop.f32.mrf.mxu0
    %v350 = vadd.f32 %v88, %v349
    %v351 = vpop.f32.mrf.mxu0
    %v352 = vadd.f32 %v92, %v351
    %v353 = vpop.f32.mrf.mxu0
    %v354 = vadd.f32 %v88, %v353
    %v355 = vpop.f32.mrf.mxu0
    %v356 = vadd.f32 %v92, %v355
    %357 = vmatprep.mubr.bf16.mxu0 0
    %358 = vmatmul.mubr.bf16.gmra.mxu0 %v168
    %v359 = vpop.f32.mrf.mxu0
    %v360 = vadd.f32 %v88, %v359
    %v361 = vpop.f32.mrf.mxu0
    %v362 = vadd.f32 %v92, %v361
    %v363 = vpop.f32.mrf.mxu0
    %v364 = vadd.f32 %v88, %v363
    %v365 = vpop.f32.mrf.mxu0
    %v366 = vadd.f32 %v92, %v365
    %367 = vmatprep.mubr.bf16.mxu0 0
    %368 = vmatmul.mubr.bf16.gmra.mxu0 %v171
    %v369 = vpop.f32.mrf.mxu0
    %v370 = vadd.f32 %v88, %v369
    %v371 = vpop.f32.mrf.mxu0
    %v372 = vadd.f32 %v92, %v371
    %v373 = vpop.f32.mrf.mxu0
    %v374 = vadd.f32 %v88, %v373
    %v375 = vpop.f32.mrf.mxu0
    %v376 = vadd.f32 %v92, %v375
    %377 = vmatprep.mubr.bf16.mxu0 0
    %378 = vmatmul.mubr.bf16.gmra.mxu0 %v174
    %v379 = vpop.f32.mrf.mxu0
    %v380 = vadd.f32 %v88, %v379
    %v381 = vpop.f32.mrf.mxu0
    %v382 = vadd.f32 %v92, %v381
    %v383 = vpop.f32.mrf.mxu0
    %v384 = vadd.f32 %v88, %v383
    %v385 = vpop.f32.mrf.mxu0
    %v386 = vadd.f32 %v92, %v385
    %387 = vmatprep.mubr.bf16.mxu0 0
    %388 = vmatmul.mubr.bf16.gmra.mxu0 %v177
    %v389 = vpop.f32.mrf.mxu0
    %v390 = vadd.f32 %v88, %v389
    %v391 = vpop.f32.mrf.mxu0
    %v392 = vadd.f32 %v92, %v391
    %v393 = vpop.f32.mrf.mxu0
    %v394 = vadd.f32 %v88, %v393
    %v395 = vpop.f32.mrf.mxu0
    %v396 = vadd.f32 %v92, %v395
    %397 = vmatprep.mubr.bf16.mxu0 0
    %398 = vmatmul.mubr.bf16.gmra.mxu0 %v180
    %v399 = vpop.f32.mrf.mxu0
    %v400 = vadd.f32 %v88, %v399
    %v401 = vpop.f32.mrf.mxu0
    %v402 = vadd.f32 %v92, %v401
    %v403 = vpop.f32.mrf.mxu0
    %v404 = vadd.f32 %v88, %v403
    %v405 = vpop.f32.mrf.mxu0
    %v406 = vadd.f32 %v92, %v405
    %407 = vdwg.mxu0
    %v408 = vpack.c.bf16 %v221, %v217
    %v409 = vpack.c.bf16 %v223, %v219
    %v410 = vpack.c.bf16 %v334, %v330
    %v411 = vpack.c.bf16 %v336, %v332
    %v412 = vpack.c.bf16 %v231, %v227
    %v413 = vpack.c.bf16 %v233, %v229
    %v414 = vpack.c.bf16 %v344, %v340
    %v415 = vpack.c.bf16 %v346, %v342
    %v416 = vpack.c.bf16 %v241, %v237
    %v417 = vpack.c.bf16 %v243, %v239
    %v418 = vpack.c.bf16 %v354, %v350
    %v419 = vpack.c.bf16 %v356, %v352
    %v420 = vpack.c.bf16 %v251, %v247
    %v421 = vpack.c.bf16 %v253, %v249
    %v422 = vpack.c.bf16 %v364, %v360
    %v423 = vpack.c.bf16 %v366, %v362
    %v424 = vpack.c.bf16 %v261, %v257
    %v425 = vpack.c.bf16 %v263, %v259
    %v426 = vpack.c.bf16 %v374, %v370
    %v427 = vpack.c.bf16 %v376, %v372
    %v428 = vpack.c.bf16 %v271, %v267
    %v429 = vpack.c.bf16 %v273, %v269
    %v430 = vpack.c.bf16 %v384, %v380
    %v431 = vpack.c.bf16 %v386, %v382
    %v432 = vpack.c.bf16 %v281, %v277
    %v433 = vpack.c.bf16 %v283, %v279
    %v434 = vpack.c.bf16 %v394, %v390
    %v435 = vpack.c.bf16 %v396, %v392
    %v436 = vpack.c.bf16 %v291, %v287
    %v437 = vpack.c.bf16 %v293, %v289
    %v438 = vpack.c.bf16 %v404, %v400
    %v439 = vpack.c.bf16 %v406, %v402
    %v472 = vunpack.c.l.b16 %v408
    %v473 = vunpack.c.l.b16 %v409
    %v474 = vunpack.c.l.b16 %v410
    %v475 = vunpack.c.l.b16 %v411
    %v476 = vunpack.c.h.b16 %v408
    %v477 = vunpack.c.h.b16 %v409
    %v478 = vunpack.c.h.b16 %v410
    %v479 = vunpack.c.h.b16 %v411
    %v480 = vunpack.c.l.b16 %v412
    %v481 = vunpack.c.l.b16 %v413
    %v482 = vunpack.c.l.b16 %v414
    %v483 = vunpack.c.l.b16 %v415
    %v484 = vunpack.c.h.b16 %v412
    %v485 = vunpack.c.h.b16 %v413
    %v486 = vunpack.c.h.b16 %v414
    %v487 = vunpack.c.h.b16 %v415
    %v488 = vunpack.c.l.b16 %v416
    %v489 = vunpack.c.l.b16 %v417
    %v490 = vunpack.c.l.b16 %v418
    %v491 = vunpack.c.l.b16 %v419
    %v492 = vunpack.c.h.b16 %v416
    %v493 = vunpack.c.h.b16 %v417
    %v494 = vunpack.c.h.b16 %v418
    %v495 = vunpack.c.h.b16 %v419
    %v496 = vunpack.c.l.b16 %v420
    %v497 = vunpack.c.l.b16 %v421
    %v498 = vunpack.c.l.b16 %v422
    %v499 = vunpack.c.l.b16 %v423
    %v500 = vunpack.c.h.b16 %v420
    %v501 = vunpack.c.h.b16 %v421
    %v502 = vunpack.c.h.b16 %v422
    %v503 = vunpack.c.h.b16 %v423
    %v504 = vunpack.c.l.b16 %v424
    %v505 = vunpack.c.l.b16 %v425
    %v506 = vunpack.c.l.b16 %v426
    %v507 = vunpack.c.l.b16 %v427
    %v508 = vunpack.c.h.b16 %v424
    %v509 = vunpack.c.h.b16 %v425
    %v510 = vunpack.c.h.b16 %v426
    %v511 = vunpack.c.h.b16 %v427
    %v512 = vunpack.c.l.b16 %v428
    %v513 = vunpack.c.l.b16 %v429
    %v514 = vunpack.c.l.b16 %v430
    %v515 = vunpack.c.l.b16 %v431
    %v516 = vunpack.c.h.b16 %v428
    %v517 = vunpack.c.h.b16 %v429
    %v518 = vunpack.c.h.b16 %v430
    %v519 = vunpack.c.h.b16 %v431
    %v520 = vunpack.c.l.b16 %v432
    %v521 = vunpack.c.l.b16 %v433
    %v522 = vunpack.c.l.b16 %v434
    %v523 = vunpack.c.l.b16 %v435
    %v524 = vunpack.c.h.b16 %v432
    %v525 = vunpack.c.h.b16 %v433
    %v526 = vunpack.c.h.b16 %v434
    %v527 = vunpack.c.h.b16 %v435
    %v528 = vunpack.c.l.b16 %v436
    %v529 = vunpack.c.l.b16 %v437
    %v530 = vunpack.c.l.b16 %v438
    %v531 = vunpack.c.l.b16 %v439
    %v532 = vunpack.c.h.b16 %v436
    %v533 = vunpack.c.h.b16 %v437
    %v534 = vunpack.c.h.b16 %v438
    %v535 = vunpack.c.h.b16 %v439
    %v536 = vpack.c.b16 %v473, %v472
    %v537 = vpack.c.b16 %v475, %v474
    %v538 = vpack.c.b16 %v477, %v476
    %v539 = vpack.c.b16 %v479, %v478
    %v540 = vpack.c.b16 %v481, %v480
    %v541 = vpack.c.b16 %v483, %v482
    %v542 = vpack.c.b16 %v485, %v484
    %v543 = vpack.c.b16 %v487, %v486
    %v544 = vpack.c.b16 %v489, %v488
    %v545 = vpack.c.b16 %v491, %v490
    %v546 = vpack.c.b16 %v493, %v492
    %v547 = vpack.c.b16 %v495, %v494
    %v548 = vpack.c.b16 %v497, %v496
    %v549 = vpack.c.b16 %v499, %v498
    %v550 = vpack.c.b16 %v501, %v500
    %v551 = vpack.c.b16 %v503, %v502
    %v552 = vpack.c.b16 %v505, %v504
    %v553 = vpack.c.b16 %v507, %v506
    %v554 = vpack.c.b16 %v509, %v508
    %v555 = vpack.c.b16 %v511, %v510
    %v556 = vpack.c.b16 %v513, %v512
    %v557 = vpack.c.b16 %v515, %v514
    %v558 = vpack.c.b16 %v517, %v516
    %v559 = vpack.c.b16 %v519, %v518
    %v560 = vpack.c.b16 %v521, %v520
    %v561 = vpack.c.b16 %v523, %v522
    %v562 = vpack.c.b16 %v525, %v524
    %v563 = vpack.c.b16 %v527, %v526
    %v564 = vpack.c.b16 %v529, %v528
    %v565 = vpack.c.b16 %v531, %v530
    %v566 = vpack.c.b16 %v533, %v532
    %v567 = vpack.c.b16 %v535, %v534
    %600 = vst [vmem:[#allocation8] sm:$0xff] %v536
    %601 = vst [vmem:[#allocation8 + $0x8] sm:$0xff] %v537
    %602 = vst [vmem:[#allocation8 + $0x10] sm:$0xff] %v538
    %603 = vst [vmem:[#allocation8 + $0x18] sm:$0xff] %v539
    %604 = vst [vmem:[#allocation8 + $0x20] sm:$0xff] %v540
    %605 = vst [vmem:[#allocation8 + $0x28] sm:$0xff] %v541
    %606 = vst [vmem:[#allocation8 + $0x30] sm:$0xff] %v542
    %607 = vst [vmem:[#allocation8 + $0x38] sm:$0xff] %v543
    %608 = vst [vmem:[#allocation8 + $0x40] sm:$0xff] %v544
    %609 = vst [vmem:[#allocation8 + $0x48] sm:$0xff] %v545
    %610 = vst [vmem:[#allocation8 + $0x50] sm:$0xff] %v546
    %611 = vst [vmem:[#allocation8 + $0x58] sm:$0xff] %v547
    %612 = vst [vmem:[#allocation8 + $0x60] sm:$0xff] %v548
    %613 = vst [vmem:[#allocation8 + $0x68] sm:$0xff] %v549
    %614 = vst [vmem:[#allocation8 + $0x70] sm:$0xff] %v550
    %615 = vst [vmem:[#allocation8 + $0x78] sm:$0xff] %v551
    %616 = vst [vmem:[#allocation8 + $0x80] sm:$0xff] %v552
    %617 = vst [vmem:[#allocation8 + $0x88] sm:$0xff] %v553
    %618 = vst [vmem:[#allocation8 + $0x90] sm:$0xff] %v554
    %619 = vst [vmem:[#allocation8 + $0x98] sm:$0xff] %v555
    %620 = vst [vmem:[#allocation8 + $0xa0] sm:$0xff] %v556
    %621 = vst [vmem:[#allocation8 + $0xa8] sm:$0xff] %v557
    %622 = vst [vmem:[#allocation8 + $0xb0] sm:$0xff] %v558
    %623 = vst [vmem:[#allocation8 + $0xb8] sm:$0xff] %v559
    %624 = vst [vmem:[#allocation8 + $0xc0] sm:$0xff] %v560
    %625 = vst [vmem:[#allocation8 + $0xc8] sm:$0xff] %v561
    %626 = vst [vmem:[#allocation8 + $0xd0] sm:$0xff] %v562
    %627 = vst [vmem:[#allocation8 + $0xd8] sm:$0xff] %v563
    %628 = vst [vmem:[#allocation8 + $0xe0] sm:$0xff] %v564
    %629 = vst [vmem:[#allocation8 + $0xe8] sm:$0xff] %v565
    %630 = vst [vmem:[#allocation8 + $0xf0] sm:$0xff] %v566
    %631 = vst [vmem:[#allocation8 + $0xf8] sm:$0xff] %v567
    // Predicated region
    $region26: #{tpu_custom_call.1} parent=1 // pred_check
      _
    $region27: #{tpu_custom_call.1} parent=1 // pred_check_branch
      %633 = sbr.rel (0) target = $region29
    $region28: #{tpu_custom_call.1} parent=1 // pred_region
      %s635 = ssub.s32 4096, 4096
      %636 = vsyncadd [#allocation4], %s635
      %s637 = sshll.u32 [#allocation8], 4
      %s638 = int_to_ptr.vmem [resolvable:$true] %s637
      %643 = dma.vmem_to_hbm [thread:$0]  %s638, 4096, %s3, [#allocation4], 256, 256, 16
    $region29: #{tpu_custom_call.1} parent=1 // pred_fallthru
      _
    // Predicated region
    $region30: #{tpu_custom_call.1} parent=1 // pred_check
      _
    $region31: #{tpu_custom_call.1} parent=1 // pred_check_branch
      %645 = sbr.rel (0) target = $region33
    $region32: #{tpu_custom_call.1} parent=1 // pred_region
      %646 = dma.done [#allocation4], 4096
    $region33: #{tpu_custom_call.1} parent=1 // pred_fallthru
      _
    %647 = vsyncpa [#allocation3], 1
    %648 = vsyncpa [#allocation6], 1
    %649 = vsyncpa [#allocation4], 1

</llo_original>
